<compile_context>
chip_gen: v7x
topology: tpu7x:2x2x1
jax: 0.10.0
libtpu: 0.0.40
codegen_flags: <defaults>
</compile_context>

<pallas_src>
import jax
import jax.numpy as jnp
from jax.experimental import pallas as pl
from jax.experimental.pallas import tpu as pltpu


def _round_up(x, m):
    return ((x + m - 1) // m) * m


def _lm_head_kernel(x_ref, w_ref, o_ref):
    # x_ref : (tile_m, H)        activation tile (compute dtype)
    # w_ref : (H, tile_n)        weight tile, canonical (K, N) layout
    # o_ref : (tile_m, tile_n)   logits tile
    o_ref[...] = jnp.dot(
        x_ref[...], w_ref[...], preferred_element_type=jnp.float32
    ).astype(o_ref.dtype)


def prepare_lm_head_weight(weight, compute_dtype=jnp.bfloat16):
    """One-time (model-load-time) weight prep, hoisted out of the hot path.

    nn.Linear stores W as [V, H]; the kernel wants [H, V] in the compute
    dtype so no per-call cast and no per-tile transpose are ever needed.
    """
    return jnp.asarray(weight).astype(compute_dtype).T  # [H, V]


def lm_head_forward(
    hidden_states,
    weight_t,
    *,
    tile_m=512,
    tile_n=2048,
    compute_dtype=jnp.bfloat16,
    out_dtype=None,
):
    """hidden_states: [B, S, H]; weight_t: [H, V] (from prepare_lm_head_weight)
    -> logits [B, S, V]."""
    B, S, H = hidden_states.shape
    H2, V = weight_t.shape
    assert H == H2, "hidden size mismatch between activations and lm_head weight"
    if out_dtype is None:
        out_dtype = hidden_states.dtype

    M = B * S
    x2d = hidden_states.reshape(M, H).astype(compute_dtype)
    w = weight_t.astype(compute_dtype)  # no-op if prepared correctly

    # Clamp tiles to the problem size, keeping (8, 128) block alignment.
    tile_m = max(8, min(tile_m, _round_up(M, 8)))
    tile_n = max(128, min(tile_n, _round_up(V, 128)))

    n_m = pl.cdiv(M, tile_m)
    n_v = pl.cdiv(V, tile_n)

    # Grid: V tiles on the OUTER axis, M tiles on the INNER axis. The weight
    # block index depends only on the outer axis, so each weight tile is
    # fetched once and stays VMEM-resident across the whole inner M sweep.
    grid = (n_v, n_m)

    # VMEM budget: double-buffered x tile, weight tile and output tile.
    cbytes = jnp.dtype(compute_dtype).itemsize
    obytes = jnp.dtype(out_dtype).itemsize
    working_set = 2 * (
        tile_m * H * cbytes + H * tile_n * cbytes + tile_m * tile_n * obytes
    )
    # Leave headroom for v7x (64 MiB physical VMEM per TensorCore).
    vmem_limit = int(min(max(working_set + (8 << 20), 32 << 20), 48 << 20))

    cost = pl.CostEstimate(
        flops=2 * M * H * V,
        transcendentals=0,
        bytes_accessed=(
            n_v * M * H * cbytes      # activations re-read once per V tile
            + V * H * cbytes          # weight read exactly once
            + M * V * obytes          # logits written once
        ),
    )

    out2d = pl.pallas_call(
        _lm_head_kernel,
        out_shape=jax.ShapeDtypeStruct((M, V), out_dtype),
        grid_spec=pltpu.PrefetchScalarGridSpec(
            num_scalar_prefetch=0,
            grid=grid,
            in_specs=[
                # activation tile: varies with the inner M axis only
                pl.BlockSpec((tile_m, H), lambda j, i: (i, 0)),
                # weight tile [H, tile_n]: varies with the outer V axis only
                # -> stays resident across the inner M sweep
                pl.BlockSpec((H, tile_n), lambda j, i: (0, j)),
            ],
            out_specs=pl.BlockSpec((tile_m, tile_n), lambda j, i: (i, j)),
        ),
        compiler_params=pltpu.CompilerParams(
            dimension_semantics=("parallel", "parallel"),
            vmem_limit_bytes=vmem_limit,
        ),
        cost_estimate=cost,
    )(x2d, w)

    return out2d.reshape(B, S, V)


if __name__ == "__main__":
    # Small synthetic shapes consistent with GPT2's lm_head.
    batch, seq, hidden, vocab = 2, 8, 32, 256

    key = jax.random.PRNGKey(0)
    k_x, k_w = jax.random.split(key)
    hidden_states = jax.random.normal(k_x, (batch, seq, hidden), dtype=jnp.float32)
    # nn.Linear weight shape: [vocab, hidden]
    weight = jax.random.normal(k_w, (vocab, hidden), dtype=jnp.float32) * 0.02

    # One-time, out-of-hot-path weight prep (bf16 cast + transpose to [H, V]).
    weight_t = prepare_lm_head_weight(weight)
    jax.block_until_ready(weight_t)

    logits = lm_head_forward(hidden_states, weight_t)
    jax.block_until_ready(logits)

    # Sanity check against plain JAX reference (bf16 compute -> loose tolerance).
    ref = jnp.einsum("bsh,vh->bsv", hidden_states, weight)
    assert logits.shape == (batch, seq, vocab)
    assert logits.dtype == hidden_states.dtype
    assert jnp.allclose(logits, ref, atol=2e-2, rtol=2e-2)

    print("KERNEL_OK")
</pallas_src>

<mosaic_0001>
module attributes {stable_mosaic.version = 11 : i64} {
  func.func @_lm_head_kernel(%arg0: i32, %arg1: i32, %arg2: memref<16x32xbf16, #tpu.memory_space<vmem>>, %arg3: memref<32x256xbf16, #tpu.memory_space<vmem>>, %arg4: memref<16x256xf32, #tpu.memory_space<vmem>>) attributes {dimension_semantics = [#tpu.dimension_semantics<parallel>, #tpu.dimension_semantics<parallel>], iteration_bounds = array<i64: 1, 1>, scalar_prefetch = 0 : i64, scratch_operands = 0 : i64, tpu.core_type = #tpu.core_type<tc>, window_params = [{transform_indices = @transform_0, window_bounds = array<i64: 16, 32>}, {transform_indices = @transform_1, window_bounds = array<i64: 32, 256>}, {transform_indices = @transform_2, window_bounds = array<i64: 16, 256>}]} {
    %c0 = arith.constant 0 : index
    %c0_0 = arith.constant 0 : index
    %0 = vector.load %arg2[%c0, %c0_0] : memref<16x32xbf16, #tpu.memory_space<vmem>>, vector<16x32xbf16>
    %c0_1 = arith.constant 0 : index
    %c0_2 = arith.constant 0 : index
    %1 = vector.load %arg3[%c0_1, %c0_2] : memref<32x256xbf16, #tpu.memory_space<vmem>>, vector<32x256xbf16>
    %cst = arith.constant dense<0.000000e+00> : vector<16x256xf32>
    %2 = tpu.matmul %0, %1, %cst {dimension_numbers = #tpu.dot_dimension_numbers<[1], [0], [0], [1], [0, 0, 1, 1], [], []>} : vector<16x32xbf16>, vector<32x256xbf16>, vector<16x256xf32> -> vector<16x256xf32>
    %c0_3 = arith.constant 0 : index
    %c0_4 = arith.constant 0 : index
    %3 = vector.load %arg4[%c0_3, %c0_4] : memref<16x256xf32, #tpu.memory_space<vmem>>, vector<16x256xf32>
    tpu.vector_store %arg4[%c0_3, %c0_4], %2 {strides = array<i32>} : memref<16x256xf32, #tpu.memory_space<vmem>>, vector<16x256xf32>,
    return
  }
  func.func @transform_0(%arg0: i32, %arg1: i32) -> (i32, i32) {
    %c0_i32 = arith.constant 0 : i32
    %c0_i32_0 = arith.constant 0 : i32
    return %arg1, %c0_i32 : i32, i32
  }
  func.func @transform_1(%arg0: i32, %arg1: i32) -> (i32, i32) {
    %c0_i32 = arith.constant 0 : i32
    %c0_i32_0 = arith.constant 0 : i32
    return %c0_i32, %arg0 : i32, i32
  }
  func.func @transform_2(%arg0: i32, %arg1: i32) -> (i32, i32) {
    %c0_i32 = arith.constant 0 : i32
    return %arg1, %arg0 : i32, i32
  }
}

</mosaic_0001>

<llo_original>
// kernel: tpu_custom_call.1
$region0: #{tpu_custom_call.1}
  #allocation0 [shape = 'u32[]', space=smem, size = 0x4, offset = 0x4, fixed_abs, tag = 'smem constant byte address 0x4 - core index']
  #allocation1 [shape = 'u32[144,128]{1,0:T(1,128)}', space=vmem, size = 0x12000, scoped, tag = 'internal scratch']
  %s0 = inlined_call_operand.hbm [shape: bf16[16,32], index: 0, kind: input, shape index: {}]
  %s1 = inlined_call_operand.hbm [shape: bf16[32,256], index: 1, kind: input, shape index: {}]
  %s2 = inlined_call_operand.hbm [shape: f32[16,256], index: 2, kind: output, shape index: {}]
  %s3 = sld [smem:[#allocation0]]
  $region26: #{tpu_custom_call.1} parent=0
    _
  %s5 = ssub.s32 1, %s3
  %s6 = scalar_select 0, %s5, %s3
  $region1: #{tpu_custom_call.1} parent=0
    #allocation2 [shape = 'u8[4096]{0}', space=vmem, size = 0x1000, scoped, tag = 'input window, operand 0, single buffered']
    #allocation3 [shape = 's32[1]{0}', space=sflag, size = 0x4, scoped, tag = 'scoped memory for tpu_custom_call.1']
    #allocation4 [shape = 's32[1]{0}', space=sflag, size = 0x4, scoped, tag = 'scoped memory for tpu_custom_call.1']
    #allocation5 [shape = 'u8[16384]{0}', space=vmem, size = 0x4000, scoped, tag = 'input window, operand 1, single buffered']
    #allocation6 [shape = 's32[1]{0}', space=sflag, size = 0x4, scoped, tag = 'scoped memory for tpu_custom_call.1']
    #allocation7 [shape = 'u8[16384]{0}', space=vmem, size = 0x4000, scoped, tag = 'output window, operand 0, single buffered']
    %7 = vsyncpa [#allocation3], 0
    %8 = vsyncpa [#allocation6], 0
    %9 = vsyncpa [#allocation4], 0
    // Predicated region
    $region2: #{tpu_custom_call.1} parent=1 // pred_check
      _
    $region3: #{tpu_custom_call.1} parent=1 // pred_check_branch
      %11 = sbr.rel (0) target = $region5
    $region4: #{tpu_custom_call.1} parent=1 // pred_region
      %s13 = ssub.s32 128, 128
      %14 = vsyncadd [#allocation3], %s13
      %s15 = sshll.u32 [#allocation2], 4
      %s16 = int_to_ptr.vmem [resolvable:$true] %s15
      %21 = dma.hbm_to_vmem [thread:$0]  %s0, 128, %s16, [#allocation3], 64, 64, 4
    $region5: #{tpu_custom_call.1} parent=1 // pred_fallthru
      _
    // Predicated region
    $region6: #{tpu_custom_call.1} parent=1 // pred_check
      _
    $region7: #{tpu_custom_call.1} parent=1 // pred_check_branch
      %23 = sbr.rel (0) target = $region9
    $region8: #{tpu_custom_call.1} parent=1 // pred_region
      %s25 = ssub.s32 512, 512
      %26 = vsyncadd [#allocation6], %s25
      %s27 = sshll.u32 [#allocation5], 4
      %s28 = int_to_ptr.vmem [resolvable:$true] %s27
      %33 = dma.hbm_to_vmem [thread:$0]  %s1, 512, %s28, [#allocation6], 128, 128, 8
    $region9: #{tpu_custom_call.1} parent=1 // pred_fallthru
      _
    // Predicated region
    $region10: #{tpu_custom_call.1} parent=1 // pred_check
      _
    $region11: #{tpu_custom_call.1} parent=1 // pred_check_branch
      %35 = sbr.rel (0) target = $region13
    $region12: #{tpu_custom_call.1} parent=1 // pred_region
      %36 = dma.done [#allocation3], 128
    $region13: #{tpu_custom_call.1} parent=1 // pred_fallthru
      _
    // Predicated region
    $region14: #{tpu_custom_call.1} parent=1 // pred_check
      _
    $region15: #{tpu_custom_call.1} parent=1 // pred_check_branch
      %38 = sbr.rel (0) target = $region17
    $region16: #{tpu_custom_call.1} parent=1 // pred_region
      %39 = dma.done [#allocation6], 512
    $region17: #{tpu_custom_call.1} parent=1 // pred_fallthru
      _
    %v41 = vld [vmem:[#allocation2] sm:$0xf]
    %v42 = vld [vmem:[#allocation2 + $0x4] sm:$0xf]
    %v43 = vld [vmem:[#allocation5] sm:$0xff]
    %v44 = vld [vmem:[#allocation5 + $0x8] sm:$0xff]
    %v45 = vld [vmem:[#allocation5 + $0x10] sm:$0xff]
    %v46 = vld [vmem:[#allocation5 + $0x18] sm:$0xff]
    %v49 = vunpack.c.l.b16 %v41
    %v50 = vunpack.c.l.b16 %v42
    %v51 = vpack.c.b16 %v50, %v49
    %v56 = vunpack.c.l.b16 %v43
    %v57 = vunpack.c.h.b16 %v43
    %v58 = vunpack.c.l.b16 %v44
    %v59 = vunpack.c.h.b16 %v44
    %v60 = vunpack.c.l.b16 %v45
    %v61 = vunpack.c.h.b16 %v45
    %v62 = vunpack.c.l.b16 %v46
    %v63 = vunpack.c.h.b16 %v46
    %v64 = vpack.c.b16 %v58, %v56
    %v65 = vpack.c.b16 %v59, %v57
    %v66 = vpack.c.b16 %v62, %v60
    %v67 = vpack.c.b16 %v63, %v61
    %vm72 = vcmask 261120
    %v74 = vsel %vm72, %v51, 0
    %76 = vmatprep.subr.bf16.mxu0 %v65
    %77 = vmatpush1.bf16.msra.mxu0 %v64
    %78 = vmatprep.subr.bf16.mxu0 %v67
    %79 = vmatpush1.bf16.msra.mxu0 %v66
    %80 = vmatprep.subr.bf16.mxu0 0
    %81 = vmatpush1.bf16.msra.mxu0 0
    %82 = vmatprep.subr.bf16.mxu0 0
    %83 = vmatpush1.bf16.msra.mxu0 0
    %84 = vmatprep.subr.bf16.mxu0 0
    %85 = vmatpush1.bf16.msra.mxu0 0
    %86 = vmatprep.subr.bf16.mxu0 0
    %87 = vmatpush1.bf16.msra.mxu0 0
    %88 = vmatprep.subr.bf16.mxu0 0
    %89 = vmatpush1.bf16.msra.mxu0 0
    %90 = vmatprep.subr.bf16.mxu0 0
    %91 = vmatpush1.bf16.msra.mxu0 0
    %92 = vmatprep.subr.bf16.mxu0 0
    %93 = vmatpush1.bf16.msra.mxu0 0
    %94 = vmatprep.subr.bf16.mxu0 0
    %95 = vmatpush1.bf16.msra.mxu0 0
    %96 = vmatprep.subr.bf16.mxu0 0
    %97 = vmatpush1.bf16.msra.mxu0 0
    %98 = vmatprep.subr.bf16.mxu0 0
    %99 = vmatpush1.bf16.msra.mxu0 0
    %100 = vmatprep.subr.bf16.mxu0 0
    %101 = vmatpush1.bf16.msra.mxu0 0
    %102 = vmatprep.subr.bf16.mxu0 0
    %103 = vmatpush1.bf16.msra.mxu0 0
    %104 = vmatprep.subr.bf16.mxu0 0
    %105 = vmatpush1.bf16.msra.mxu0 0
    %106 = vmatprep.subr.bf16.mxu0 0
    %107 = vmatpush1.bf16.msra.mxu0 0
    %108 = vmatprep.mubr.bf16.mxu0 0
    %109 = vmatmul.mubr.bf16.gmra.mrb[0].mxu0 %v74
    %v110 = vpop.f32.mrb[0].mxu0
    %v111 = vadd.f32 0.0, %v110
    %v112 = vpop.f32.mrb[0].mxu0
    %v113 = vadd.f32 0.0, %v112
    %v114 = vpop.f32.mrb[0].mxu0
    %v115 = vadd.f32 0.0, %v114
    %v116 = vpop.f32.mrb[0].mxu0
    %v117 = vadd.f32 0.0, %v116
    %118 = vdwg.mxu0
    %119 = vst [vmem:[#allocation7] sm:$0xff] %v111
    %120 = vst [vmem:[#allocation7 + $0x8] sm:$0xff] %v113
    %121 = vst [vmem:[#allocation7 + $0x10] sm:$0xff] %v115
    %122 = vst [vmem:[#allocation7 + $0x18] sm:$0xff] %v117
    // Predicated region
    $region18: #{tpu_custom_call.1} parent=1 // pred_check
      _
    $region19: #{tpu_custom_call.1} parent=1 // pred_check_branch
      %124 = sbr.rel (0) target = $region21
    $region20: #{tpu_custom_call.1} parent=1 // pred_region
      %s126 = ssub.s32 512, 512
      %127 = vsyncadd [#allocation4], %s126
      %s128 = sshll.u32 [#allocation7], 4
      %s129 = int_to_ptr.vmem [resolvable:$true] %s128
      %134 = dma.vmem_to_hbm [thread:$0]  %s129, 512, %s2, [#allocation4], 256, 256, 16
    $region21: #{tpu_custom_call.1} parent=1 // pred_fallthru
      _
    // Predicated region
    $region22: #{tpu_custom_call.1} parent=1 // pred_check
      _
    $region23: #{tpu_custom_call.1} parent=1 // pred_check_branch
      %136 = sbr.rel (0) target = $region25
    $region24: #{tpu_custom_call.1} parent=1 // pred_region
      %137 = dma.done [#allocation4], 512
    $region25: #{tpu_custom_call.1} parent=1 // pred_fallthru
      _
    %138 = vsyncpa [#allocation3], 1
    %139 = vsyncpa [#allocation6], 1
    %140 = vsyncpa [#allocation4], 1

</llo_original>
